<compile_context>
chip_gen: v7x
topology: tpu7x:2x2x1
jax: 0.10.0
libtpu: 0.0.40
codegen_flags: <defaults>
</compile_context>

<pallas_src>
import jax
import jax.numpy as jnp
from jax.experimental import pallas as pl
from jax.experimental.pallas import tpu as pltpu


def _l2norm_kernel(x_ref, o_ref):
    # x_ref / o_ref: (tile_rows, D_pad) blocks in VMEM.
    x = x_ref[...]
    # Accumulate sum of squares in f32 (stable for bf16 inputs).
    xf = x.astype(jnp.float32)
    sq_sum = jnp.sum(xf * xf, axis=1, keepdims=True)          # (tm, 1)
    # rsqrt on the tiny (tm, 1) vector runs on the EUP; the broadcasted
    # multiply is a single cheap VALU op in the input's native dtype.
    inv = jax.lax.rsqrt(sq_sum)                                # (tm, 1), f32
    o_ref[...] = (x * inv.astype(x.dtype)).astype(o_ref.dtype)


def _round_up(a, b):
    return ((a + b - 1) // b) * b


def l2_norm(x, *, max_tile_rows=1024, vmem_tile_budget_bytes=24 * 1024 * 1024):
    """L2-normalize each row of a 2-D array (batch/num_classes, feature_dim)."""
    assert x.ndim == 2, "expected (batch_size, feature_dim)"
    B, D = x.shape
    dtype = x.dtype
    itemsize = jnp.dtype(dtype).itemsize
    # Sublane alignment: 8 rows for 32-bit, 16 for 16-bit (packed sublanes).
    row_align = 16 if itemsize < 4 else 8

    # Lane-dense feature dim: pad to a multiple of 128. Zero columns do not
    # change the row norm, so this is semantics-preserving.
    D_pad = max(128, _round_up(D, 128))

    # Per-row VMEM footprint: double-buffered input + output tiles
    # (2 buffers x 2 arrays) plus the f32 working copy inside the kernel.
    per_row_bytes = D_pad * itemsize * 4 + D_pad * 4
    tm = vmem_tile_budget_bytes // per_row_bytes
    tm = max(row_align, (tm // row_align) * row_align)
    tm = min(tm, max_tile_rows)
    # Never tile past the (aligned) row count.
    tm = min(tm, _round_up(B, row_align))

    B_pad = _round_up(B, tm)

    xp = x
    if (B_pad, D_pad) != (B, D):
        # Zero-pad; padded rows produce NaN (0 * inf) but are sliced off below.
        xp = jnp.zeros((B_pad, D_pad), dtype).at[:B, :D].set(x)

    grid = (B_pad // tm,)

    out = pl.pallas_call(
        _l2norm_kernel,
        out_shape=jax.ShapeDtypeStruct((B_pad, D_pad), dtype),
        grid_spec=pltpu.PrefetchScalarGridSpec(
            num_scalar_prefetch=0,
            grid=grid,
            in_specs=[pl.BlockSpec((tm, D_pad), lambda i: (i, 0))],
            out_specs=pl.BlockSpec((tm, D_pad), lambda i: (i, 0)),
        ),
        compiler_params=pltpu.CompilerParams(
            dimension_semantics=("parallel",),
            vmem_limit_bytes=48 * 1024 * 1024,
        ),
    )(xp)

    if (B_pad, D_pad) != (B, D):
        out = out[:B, :D]
    return out


if __name__ == "__main__":
    key = jax.random.PRNGKey(0)

    # Small demo shape consistent with (batch_size, feature_dim).
    B, D = 16, 32
    x = jax.random.normal(key, (B, D), dtype=jnp.float32)

    out = l2_norm(x)
    out = jax.block_until_ready(out)

    ref = x / jnp.linalg.norm(x, axis=1, keepdims=True)
    assert out.shape == x.shape
    assert jnp.allclose(out, ref, atol=1e-5, rtol=1e-5)

    # Ragged / non-aligned shape to exercise the padding + slicing path.
    x2 = jax.random.normal(jax.random.PRNGKey(1), (10, 200), dtype=jnp.float32)
    out2 = jax.block_until_ready(l2_norm(x2))
    ref2 = x2 / jnp.linalg.norm(x2, axis=1, keepdims=True)
    assert out2.shape == x2.shape
    assert jnp.allclose(out2, ref2, atol=1e-5, rtol=1e-5)

    print("KERNEL_OK")
</pallas_src>

<mosaic_0001>
module attributes {stable_mosaic.version = 11 : i64} {
  func.func @_l2norm_kernel(%arg0: i32, %arg1: memref<16x128xf32, #tpu.memory_space<vmem>>, %arg2: memref<16x128xf32, #tpu.memory_space<vmem>>) attributes {dimension_semantics = [#tpu.dimension_semantics<parallel>], iteration_bounds = array<i64: 1>, scalar_prefetch = 0 : i64, scratch_operands = 0 : i64, tpu.core_type = #tpu.core_type<tc>, window_params = [{transform_indices = @transform_0, window_bounds = array<i64: 16, 128>}, {transform_indices = @transform_1, window_bounds = array<i64: 16, 128>}]} {
    %c0 = arith.constant 0 : index
    %c0_0 = arith.constant 0 : index
    %0 = vector.load %arg1[%c0, %c0_0] : memref<16x128xf32, #tpu.memory_space<vmem>>, vector<16x128xf32>
    %1 = arith.mulf %0, %0 : vector<16x128xf32>
    %cst = arith.constant dense<0.000000e+00> : vector<16xf32>
    %2 = vector.multi_reduction <add>, %1, %cst [1] : vector<16x128xf32> to vector<16xf32>
    %3 = vector.shape_cast %2 : vector<16xf32> to vector<16x1xf32>
    %4 = math.rsqrt %3 : vector<16x1xf32>
    %5 = vector.broadcast %4 : vector<16x1xf32> to vector<16x128xf32>
    %6 = arith.mulf %0, %5 : vector<16x128xf32>
    %c0_1 = arith.constant 0 : index
    %c0_2 = arith.constant 0 : index
    %7 = vector.load %arg2[%c0_1, %c0_2] : memref<16x128xf32, #tpu.memory_space<vmem>>, vector<16x128xf32>
    tpu.vector_store %arg2[%c0_1, %c0_2], %6 {strides = array<i32>} : memref<16x128xf32, #tpu.memory_space<vmem>>, vector<16x128xf32>,
    return
  }
  func.func @transform_0(%arg0: i32) -> (i32, i32) {
    %c0_i32 = arith.constant 0 : i32
    %c0_i32_0 = arith.constant 0 : i32
    return %arg0, %c0_i32 : i32, i32
  }
  func.func @transform_1(%arg0: i32) -> (i32, i32) {
    %c0_i32 = arith.constant 0 : i32
    %c0_i32_0 = arith.constant 0 : i32
    return %arg0, %c0_i32 : i32, i32
  }
}

</mosaic_0001>

<llo_original>
// kernel: tpu_custom_call.1
$region0: #{tpu_custom_call.1}
  #allocation0 [shape = 'u32[]', space=smem, size = 0x4, offset = 0x4, fixed_abs, tag = 'smem constant byte address 0x4 - core index']
  #allocation1 [shape = 'u32[144,128]{1,0:T(1,128)}', space=vmem, size = 0x12000, scoped, tag = 'internal scratch']
  %s0 = inlined_call_operand.hbm [shape: f32[16,128], index: 0, kind: input, shape index: {}]
  %s1 = inlined_call_operand.hbm [shape: f32[16,128], index: 1, kind: output, shape index: {}]
  %s2 = sld [smem:[#allocation0]]
  $region18: #{tpu_custom_call.1} parent=0
    _
  %s4 = ssub.s32 1, %s2
  %s5 = scalar_select 0, %s4, %s2
  $region1: #{tpu_custom_call.1} parent=0
    #allocation2 [shape = 'u8[8192]{0}', space=vmem, size = 0x2000, scoped, tag = 'input window, operand 0, single buffered']
    #allocation3 [shape = 's32[1]{0}', space=sflag, size = 0x4, scoped, tag = 'scoped memory for tpu_custom_call.1']
    #allocation4 [shape = 's32[1]{0}', space=sflag, size = 0x4, scoped, tag = 'scoped memory for tpu_custom_call.1']
    #allocation5 [shape = 'u8[8192]{0}', space=vmem, size = 0x2000, scoped, tag = 'output window, operand 0, single buffered']
    %6 = vsyncpa [#allocation3], 0
    %7 = vsyncpa [#allocation4], 0
    // Predicated region
    $region2: #{tpu_custom_call.1} parent=1 // pred_check
      _
    $region3: #{tpu_custom_call.1} parent=1 // pred_check_branch
      %9 = sbr.rel (0) target = $region5
    $region4: #{tpu_custom_call.1} parent=1 // pred_region
      %s11 = ssub.s32 256, 256
      %12 = vsyncadd [#allocation3], %s11
      %s13 = sshll.u32 [#allocation2], 4
      %s14 = int_to_ptr.vmem [resolvable:$true] %s13
      %19 = dma.hbm_to_vmem [thread:$0]  %s0, 256, %s14, [#allocation3], 128, 128, 8
    $region5: #{tpu_custom_call.1} parent=1 // pred_fallthru
      _
    // Predicated region
    $region6: #{tpu_custom_call.1} parent=1 // pred_check
      _
    $region7: #{tpu_custom_call.1} parent=1 // pred_check_branch
      %21 = sbr.rel (0) target = $region9
    $region8: #{tpu_custom_call.1} parent=1 // pred_region
      %22 = dma.done [#allocation3], 256
    $region9: #{tpu_custom_call.1} parent=1 // pred_fallthru
      _
    %v23 = vld [vmem:[#allocation2] sm:$0xff]
    %v24 = vld [vmem:[#allocation2 + $0x8] sm:$0xff]
    %v25 = vmul.f32 %v23, %v23
    %v26 = vmul.f32 %v24, %v24
    %27 = vadd.xlane.f32.xlu0 %v25
    %v28 = vpop.xlane.xlu0 %27
    %29 = vadd.xlane.f32.xlu0 %v26
    %v30 = vpop.xlane.xlu0 %29
    %v31 = vrsqrt.pop %v28
    %v32 = vrsqrt.pop %v30
    %v33 = vmul.f32 %v23, %v31
    %v34 = vmul.f32 %v24, %v32
    %35 = vst [vmem:[#allocation5] sm:$0xff] %v33
    %36 = vst [vmem:[#allocation5 + $0x8] sm:$0xff] %v34
    // Predicated region
    $region10: #{tpu_custom_call.1} parent=1 // pred_check
      _
    $region11: #{tpu_custom_call.1} parent=1 // pred_check_branch
      %38 = sbr.rel (0) target = $region13
    $region12: #{tpu_custom_call.1} parent=1 // pred_region
      %s40 = ssub.s32 256, 256
      %41 = vsyncadd [#allocation4], %s40
      %s42 = sshll.u32 [#allocation5], 4
      %s43 = int_to_ptr.vmem [resolvable:$true] %s42
      %48 = dma.vmem_to_hbm [thread:$0]  %s43, 256, %s1, [#allocation4], 128, 128, 8
    $region13: #{tpu_custom_call.1} parent=1 // pred_fallthru
      _
    // Predicated region
    $region14: #{tpu_custom_call.1} parent=1 // pred_check
      _
    $region15: #{tpu_custom_call.1} parent=1 // pred_check_branch
      %50 = sbr.rel (0) target = $region17
    $region16: #{tpu_custom_call.1} parent=1 // pred_region
      %51 = dma.done [#allocation4], 256
    $region17: #{tpu_custom_call.1} parent=1 // pred_fallthru
      _
    %52 = vsyncpa [#allocation3], 1
    %53 = vsyncpa [#allocation4], 1

</llo_original>
